<compile_context>
chip_gen: v6e
topology: v6e:2x2x1
jax: 0.10.0
libtpu: 0.0.40
codegen_flags: <defaults>
</compile_context>

<pallas_src>
import jax
import jax.numpy as jnp
from jax import lax
from jax.experimental import pallas as pl
from jax.experimental.pallas import tpu as pltpu


def _round_up(x, m):
    return ((x + m - 1) // m) * m


def mlp_kernel(x_ref, w1_ref, b1_ref, w2_ref, b2_ref, o_ref):
    # Cast activations to the matmul dtype (bf16 on v6e/v7x, f32 otherwise);
    # accumulation is always f32 via preferred_element_type.
    x = x_ref[...].astype(w1_ref.dtype)

    # Layer 1: x[TB, D_in] contracted with w1[H, D_in] over D_in -> [TB, H]
    h = lax.dot_general(
        x, w1_ref[...],
        dimension_numbers=(((1,), (1,)), ((), ())),
        preferred_element_type=jnp.float32,
    )
    b1 = b1_ref[...]                 # read once; broadcast in the add (f32)
    h = jnp.tanh(h + b1)             # f32 elementwise (VPU/EUP), safe on v5e

    # Layer 2: h[TB, H] contracted with w2[D_out_p, H] over H -> [TB, D_out_p]
    y = lax.dot_general(
        h.astype(w2_ref.dtype), w2_ref[...],
        dimension_numbers=(((1,), (1,)), ((), ())),
        preferred_element_type=jnp.float32,
    )
    b2 = b2_ref[...]
    y = jax.nn.sigmoid(y + b2)       # f32 elementwise

    # Lane-dense store: D_out was padded to a multiple of 128, so this is an
    # unmasked full-lane vst.
    o_ref[...] = y.astype(o_ref.dtype)


def prepare_params(w1, b1, w2, b2, *, matmul_dtype=jnp.bfloat16):
    """One-time parameter layout prep (run at load time, NOT per call).

    Keeps the PyTorch layouts [H, D_in] / [D_out, H] (no transposes), pads the
    output feature dim to a lane-dense multiple of 128, and casts weights to the
    MXU matmul dtype (biases stay f32 for the elementwise path).
    """
    H, D_in = w1.shape
    D_out = w2.shape[0]
    D_out_p = _round_up(max(D_out, 128), 128)

    w2_p = jnp.zeros((D_out_p, H), dtype=w2.dtype).at[:D_out, :].set(w2)
    b2_p = jnp.zeros((D_out_p,), dtype=b2.dtype).at[:D_out].set(b2)

    return {
        "w1": w1.astype(matmul_dtype),                    # [H, D_in]
        "b1": b1.reshape(1, H).astype(jnp.float32),       # [1, H]
        "w2": w2_p.astype(matmul_dtype),                  # [D_out_p, H]
        "b2": b2_p.reshape(1, D_out_p).astype(jnp.float32),
        "d_out": D_out,
    }


def mlp_forward(x, params, *, tb=512):
    """x: [B, D_in] f32. Returns sigmoid(tanh(x @ W1^T + b1) @ W2^T + b2), [B, D_out]."""
    B, D_in = x.shape
    H = params["w1"].shape[0]
    D_out_p = params["w2"].shape[0]
    D_out = params["d_out"]

    # Batch tile: multiple of 8 (f32 sublane), capped by (padded) batch size.
    assert tb % 8 == 0, "tb must be a multiple of 8"
    tb = min(tb, _round_up(B, 8))
    B_p = _round_up(B, tb)
    x_p = x if B_p == B else jnp.pad(x, ((0, B_p - B), (0, 0)))

    grid = (B_p // tb,)

    out_p = pl.pallas_call(
        mlp_kernel,
        out_shape=jax.ShapeDtypeStruct((B_p, D_out_p), x.dtype),
        grid_spec=pltpu.PrefetchScalarGridSpec(
            num_scalar_prefetch=0,
            grid=grid,
            in_specs=[
                # Activations: tiled over the batch grid -> pipelined DMA.
                pl.BlockSpec((tb, D_in), lambda i: (i, 0)),
                # Weights / biases: constant index_map -> VMEM-resident, DMA'd once.
                pl.BlockSpec((H, D_in), lambda i: (0, 0)),
                pl.BlockSpec((1, H), lambda i: (0, 0)),
                pl.BlockSpec((D_out_p, H), lambda i: (0, 0)),
                pl.BlockSpec((1, D_out_p), lambda i: (0, 0)),
            ],
            out_specs=pl.BlockSpec((tb, D_out_p), lambda i: (i, 0)),
        ),
        compiler_params=pltpu.CompilerParams(
            # Batch blocks are independent -> shard across v7x's 2 TensorCores.
            dimension_semantics=("parallel",),
            # Explicit budget: fits v7x's 64 MiB physical VMEM, raises v5e default.
            vmem_limit_bytes=48 * 1024 * 1024,
        ),
    )(x_p, params["w1"], params["b1"], params["w2"], params["b2"])

    # Strip batch padding and the lane-dense output padding.
    return out_p[:B, :D_out]


def xavier_uniform(key, fan_out, fan_in, dtype=jnp.float32):
    # Matches torch.nn.init.xavier_uniform_ for a [fan_out, fan_in] weight.
    limit = jnp.sqrt(6.0 / (fan_in + fan_out))
    return jax.random.uniform(key, (fan_out, fan_in), dtype=dtype,
                              minval=-limit, maxval=limit)


if __name__ == "__main__":
    # Small shapes consistent with the module's forward: x is [B, input_dim].
    B, input_dim, hidden_dim, output_dim = 256, 32, 64, 16

    key = jax.random.PRNGKey(0)
    k_x, k_w1, k_b1, k_w2, k_b2 = jax.random.split(key, 5)

    x = jax.random.normal(k_x, (B, input_dim), dtype=jnp.float32)

    # Deterministic parameter init (xavier uniform weights like the module;
    # PyTorch Linear default-style uniform biases).
    w1 = xavier_uniform(k_w1, hidden_dim, input_dim)
    b1 = jax.random.uniform(k_b1, (hidden_dim,), minval=-1.0 / jnp.sqrt(input_dim),
                            maxval=1.0 / jnp.sqrt(input_dim))
    w2 = xavier_uniform(k_w2, output_dim, hidden_dim)
    b2 = jax.random.uniform(k_b2, (output_dim,), minval=-1.0 / jnp.sqrt(hidden_dim),
                            maxval=1.0 / jnp.sqrt(hidden_dim))

    # Pure-JAX reference of the PyTorch forward.
    ref = jax.nn.sigmoid(jnp.tanh(x @ w1.T + b1) @ w2.T + b2)

    # --- f32 matmul path (exact check) ---
    params_f32 = prepare_params(w1, b1, w2, b2, matmul_dtype=jnp.float32)
    out_f32 = mlp_forward(x, params_f32, tb=128)   # 2 grid steps at B=256
    jax.block_until_ready(out_f32)
    assert out_f32.shape == (B, output_dim)
    assert jnp.allclose(out_f32, ref, atol=1e-5, rtol=1e-5)

    # Ragged batch (not a multiple of the tile) goes through the padding path.
    out_ragged = mlp_forward(x[:200], params_f32, tb=128)
    jax.block_until_ready(out_ragged)
    assert out_ragged.shape == (200, output_dim)
    assert jnp.allclose(out_ragged, ref[:200], atol=1e-5, rtol=1e-5)

    # --- bf16 MXU path (f32 accumulate, f32 elementwise) for v6e/v7x throughput ---
    params_bf16 = prepare_params(w1, b1, w2, b2, matmul_dtype=jnp.bfloat16)
    out_bf16 = mlp_forward(x, params_bf16, tb=128)
    jax.block_until_ready(out_bf16)
    assert out_bf16.shape == (B, output_dim)
    assert jnp.allclose(out_bf16, ref, atol=2e-2, rtol=2e-2)

    print("KERNEL_OK")
</pallas_src>

<mosaic_0001>
module attributes {stable_mosaic.version = 11 : i64} {
  func.func @mlp_kernel(%arg0: i32, %arg1: memref<128x32xf32, #tpu.memory_space<vmem>>, %arg2: memref<64x32xf32, #tpu.memory_space<vmem>>, %arg3: memref<1x64xf32, #tpu.memory_space<vmem>>, %arg4: memref<128x64xf32, #tpu.memory_space<vmem>>, %arg5: memref<1x128xf32, #tpu.memory_space<vmem>>, %arg6: memref<128x128xf32, #tpu.memory_space<vmem>>) attributes {dimension_semantics = [#tpu.dimension_semantics<parallel>], iteration_bounds = array<i64: 2>, scalar_prefetch = 0 : i64, scratch_operands = 0 : i64, tpu.core_type = #tpu.core_type<tc>, window_params = [{transform_indices = @transform_0, window_bounds = array<i64: 128, 32>}, {pipeline_mode = #tpu.pipeline_mode<synchronous>, transform_indices = @transform_1, window_bounds = array<i64: 64, 32>}, {pipeline_mode = #tpu.pipeline_mode<synchronous>, transform_indices = @transform_2, window_bounds = array<i64: 1, 64>}, {pipeline_mode = #tpu.pipeline_mode<synchronous>, transform_indices = @transform_3, window_bounds = array<i64: 128, 64>}, {pipeline_mode = #tpu.pipeline_mode<synchronous>, transform_indices = @transform_4, window_bounds = array<i64: 1, 128>}, {transform_indices = @transform_5, window_bounds = array<i64: 128, 128>}]} {
    %c0 = arith.constant 0 : index
    %c0_0 = arith.constant 0 : index
    %0 = vector.load %arg1[%c0, %c0_0] : memref<128x32xf32, #tpu.memory_space<vmem>>, vector<128x32xf32>
    %c0_1 = arith.constant 0 : index
    %c0_2 = arith.constant 0 : index
    %1 = vector.load %arg2[%c0_1, %c0_2] : memref<64x32xf32, #tpu.memory_space<vmem>>, vector<64x32xf32>
    %cst = arith.constant dense<0.000000e+00> : vector<128x64xf32>
    %2 = tpu.matmul %0, %1, %cst {dimension_numbers = #tpu.dot_dimension_numbers<[1], [1], [0], [0], [0, 0, 1, 0], [], []>} : vector<128x32xf32>, vector<64x32xf32>, vector<128x64xf32> -> vector<128x64xf32>
    %c0_3 = arith.constant 0 : index
    %c0_4 = arith.constant 0 : index
    %3 = vector.load %arg3[%c0_3, %c0_4] : memref<1x64xf32, #tpu.memory_space<vmem>>, vector<1x64xf32>
    %4 = vector.broadcast %3 : vector<1x64xf32> to vector<128x64xf32>
    %5 = arith.addf %2, %4 : vector<128x64xf32>
    %6 = math.tanh %5 : vector<128x64xf32>
    %c0_5 = arith.constant 0 : index
    %c0_6 = arith.constant 0 : index
    %7 = vector.load %arg4[%c0_5, %c0_6] : memref<128x64xf32, #tpu.memory_space<vmem>>, vector<128x64xf32>
    %cst_7 = arith.constant dense<0.000000e+00> : vector<128x128xf32>
    %8 = tpu.matmul %6, %7, %cst_7 {dimension_numbers = #tpu.dot_dimension_numbers<[1], [1], [0], [0], [0, 0, 1, 0], [], []>} : vector<128x64xf32>, vector<128x64xf32>, vector<128x128xf32> -> vector<128x128xf32>
    %c0_8 = arith.constant 0 : index
    %c0_9 = arith.constant 0 : index
    %9 = vector.load %arg5[%c0_8, %c0_9] : memref<1x128xf32, #tpu.memory_space<vmem>>, vector<1x128xf32>
    %10 = vector.broadcast %9 : vector<1x128xf32> to vector<128x128xf32>
    %11 = arith.addf %8, %10 : vector<128x128xf32>
    %12 = arith.negf %11 : vector<128x128xf32>
    %13 = math.exp %12 : vector<128x128xf32>
    %cst_10 = arith.constant 1.000000e+00 : f32
    %14 = vector.broadcast %cst_10 : f32 to vector<128x128xf32>
    %15 = arith.addf %14, %13 : vector<128x128xf32>
    %16 = arith.divf %14, %15 : vector<128x128xf32>
    %c0_11 = arith.constant 0 : index
    %c0_12 = arith.constant 0 : index
    %17 = vector.load %arg6[%c0_11, %c0_12] : memref<128x128xf32, #tpu.memory_space<vmem>>, vector<128x128xf32>
    tpu.vector_store %arg6[%c0_11, %c0_12], %16 {strides = array<i32>} : memref<128x128xf32, #tpu.memory_space<vmem>>, vector<128x128xf32>,
    return
  }
  func.func @transform_0(%arg0: i32) -> (i32, i32) {
    %c0_i32 = arith.constant 0 : i32
    %c0_i32_0 = arith.constant 0 : i32
    return %arg0, %c0_i32 : i32, i32
  }
  func.func @transform_1(%arg0: i32) -> (i32, i32) {
    %c0_i32 = arith.constant 0 : i32
    %c0_i32_0 = arith.constant 0 : i32
    %c0_i32_1 = arith.constant 0 : i32
    return %c0_i32, %c0_i32_0 : i32, i32
  }
  func.func @transform_2(%arg0: i32) -> (i32, i32) {
    %c0_i32 = arith.constant 0 : i32
    %c0_i32_0 = arith.constant 0 : i32
    %c0_i32_1 = arith.constant 0 : i32
    return %c0_i32, %c0_i32_0 : i32, i32
  }
  func.func @transform_3(%arg0: i32) -> (i32, i32) {
    %c0_i32 = arith.constant 0 : i32
    %c0_i32_0 = arith.constant 0 : i32
    %c0_i32_1 = arith.constant 0 : i32
    return %c0_i32, %c0_i32_0 : i32, i32
  }
  func.func @transform_4(%arg0: i32) -> (i32, i32) {
    %c0_i32 = arith.constant 0 : i32
    %c0_i32_0 = arith.constant 0 : i32
    %c0_i32_1 = arith.constant 0 : i32
    return %c0_i32, %c0_i32_0 : i32, i32
  }
  func.func @transform_5(%arg0: i32) -> (i32, i32) {
    %c0_i32 = arith.constant 0 : i32
    %c0_i32_0 = arith.constant 0 : i32
    return %arg0, %c0_i32 : i32, i32
  }
}

</mosaic_0001>

<llo_original>
// kernel: tpu_custom_call.1
$region0: #{tpu_custom_call.1}
  #allocation0 [shape = 'u32[]', space=smem, size = 0x4, offset = 0x4, fixed_abs, tag = 'smem constant byte address 0x4 - core index']
  #allocation1 [shape = 'u32[144,128]{1,0:T(1,128)}', space=vmem, size = 0x12000, scoped, tag = 'internal scratch']
  %s0 = inlined_call_operand.vmem [shape: f32[256,32], index: 0, kind: input, shape index: {}]
  %s1 = inlined_call_operand.vmem [shape: f32[64,32], index: 1, kind: input, shape index: {}]
  %s2 = inlined_call_operand.vmem [shape: f32[1,64], index: 2, kind: input, shape index: {}]
  %s3 = inlined_call_operand.vmem [shape: f32[128,64], index: 3, kind: input, shape index: {}]
  %s4 = inlined_call_operand.vmem [shape: f32[1,128], index: 4, kind: input, shape index: {}]
  %s5 = inlined_call_operand.hbm [shape: f32[256,128], index: 5, kind: output, shape index: {}]
  %s6 = sld [smem:[#allocation0]]
  $region53: #{tpu_custom_call.1} parent=0
    _
  %s8 = ssub.s32 1, %s6
  %s9 = scalar_select 0, %s8, %s6
  $region1: #{tpu_custom_call.1} parent=0
    #allocation2 [shape = 'u8[131072]{0}', space=vmem, size = 0x20000, scoped, tag = 'output window, operand 0']
    #allocation3 [shape = 's32[2]{0}', space=sflag, size = 0x8, scoped, tag = 'scoped memory for tpu_custom_call.1']
    %10 = vsyncpa [#allocation3], 0
    %s11 = scalar_lea.sflag [#allocation3], 1
    %12 = vsyncpa %s11, 0
    loop: start=0, step=1, limit=4
    $region2: #{tpu_custom_call.1} parent=1 // loop_pre_header
      _
    $region3: #{tpu_custom_call.1} parent=1 // loop_header
      %s14 = sphi 0, %s18
      %p15 = scmp.ge.s32.totalorder %s14, 4
      %s24 = sphi 0, %s26
      %s27 = sphi 0, %s24
      %s28 = sphi 0, %s27
      %s44 = sphi 0, %s28
      %s48 = sphi 0, %s48
      %s50 = sphi 0, %s48
      %s51 = sphi 0, %s50
      %s65 = sphi 0, %s51
      %s69 = sphi 0, %s69
      %s71 = sphi 0, %s69
      %s72 = sphi 0, %s71
      %s86 = sphi 0, %s72
      %s90 = sphi 0, %s90
      %s92 = sphi 0, %s90
      %s93 = sphi 0, %s92
      %s107 = sphi 0, %s93
      %s111 = sphi 0, %s111
      %s113 = sphi 0, %s111
      %s114 = sphi 0, %s113
      %s128 = sphi 0, %s114
      %s134 = sphi 0, %s136
      %s137 = sphi 0, %s134
      %s138 = sphi 0, %s137
      %s154 = sphi 0, %s138
    $region4: #{tpu_custom_call.1} parent=1 // loop_header_branch
      %17 = sbr.rel (%p15) target = $region8
    $region5: #{tpu_custom_call.1} parent=1 // loop_body
      %s19 = ssub.s32 %s14, 1
      %s20 = ssub.s32 %s14, 2
      %s21 = sadd.s32 %s14, 1
      %s22 = ssub.s32 %s14, %s21
      %p23 = scmp.eq.s32.totalorder %s22, 0
      %s25 = sadd.s32 %s24, 1
      %s26 = scalar_select %p23, %s24, %s25
      %p29 = pneg %p23
      %p30 = scmp.eq.s32.totalorder %s14, 1
      %p31 = por %p29, %p30
      %p32 = scmp.ne.s32.totalorder %s24, %s27
      %p33 = scmp.eq.s32.totalorder %s14, 0
      %p34 = por %p32, %p33
      %p35 = scmp.ne.s32.totalorder %s24, %s27
      %p36 = scmp.eq.s32.totalorder %s19, 1
      %p37 = por %p35, %p36
      %p38 = scmp.ne.s32.totalorder %s27, %s28
      %p39 = scmp.eq.s32.totalorder %s19, 0
      %p40 = por %p38, %p39
      %p41 = scmp.ne.s32.totalorder %s27, %s28
      %p42 = scmp.eq.s32.totalorder %s20, 1
      %p43 = por %p41, %p42
      %p45 = scmp.ne.s32.totalorder %s28, %s44
      %p46 = scmp.eq.s32.totalorder %s20, 0
      %p47 = por %p45, %p46
      %s49 = sadd.s32 %s48, 1
      %p52 = scmp.eq.s32.totalorder %s14, 1
      %p53 = scmp.ne.s32.totalorder %s48, %s50
      %p54 = scmp.eq.s32.totalorder %s14, 0
      %p55 = por %p53, %p54
      %p56 = scmp.ne.s32.totalorder %s48, %s50
      %p57 = scmp.eq.s32.totalorder %s19, 1
      %p58 = por %p56, %p57
      %p59 = scmp.ne.s32.totalorder %s50, %s51
      %p60 = scmp.eq.s32.totalorder %s19, 0
      %p61 = por %p59, %p60
      %p62 = scmp.ne.s32.totalorder %s50, %s51
      %p63 = scmp.eq.s32.totalorder %s20, 1
      %p64 = por %p62, %p63
      %p66 = scmp.ne.s32.totalorder %s51, %s65
      %p67 = scmp.eq.s32.totalorder %s20, 0
      %p68 = por %p66, %p67
      %s70 = sadd.s32 %s69, 1
      %p73 = scmp.eq.s32.totalorder %s14, 1
      %p74 = scmp.ne.s32.totalorder %s69, %s71
      %p75 = scmp.eq.s32.totalorder %s14, 0
      %p76 = por %p74, %p75
      %p77 = scmp.ne.s32.totalorder %s69, %s71
      %p78 = scmp.eq.s32.totalorder %s19, 1
      %p79 = por %p77, %p78
      %p80 = scmp.ne.s32.totalorder %s71, %s72
      %p81 = scmp.eq.s32.totalorder %s19, 0
      %p82 = por %p80, %p81
      %p83 = scmp.ne.s32.totalorder %s71, %s72
      %p84 = scmp.eq.s32.totalorder %s20, 1
      %p85 = por %p83, %p84
      %p87 = scmp.ne.s32.totalorder %s72, %s86
      %p88 = scmp.eq.s32.totalorder %s20, 0
      %p89 = por %p87, %p88
      %s91 = sadd.s32 %s90, 1
      %p94 = scmp.eq.s32.totalorder %s14, 1
      %p95 = scmp.ne.s32.totalorder %s90, %s92
      %p96 = scmp.eq.s32.totalorder %s14, 0
      %p97 = por %p95, %p96
      %p98 = scmp.ne.s32.totalorder %s90, %s92
      %p99 = scmp.eq.s32.totalorder %s19, 1
      %p100 = por %p98, %p99
      %p101 = scmp.ne.s32.totalorder %s92, %s93
      %p102 = scmp.eq.s32.totalorder %s19, 0
      %p103 = por %p101, %p102
      %p104 = scmp.ne.s32.totalorder %s92, %s93
      %p105 = scmp.eq.s32.totalorder %s20, 1
      %p106 = por %p104, %p105
      %p108 = scmp.ne.s32.totalorder %s93, %s107
      %p109 = scmp.eq.s32.totalorder %s20, 0
      %p110 = por %p108, %p109
      %s112 = sadd.s32 %s111, 1
      %p115 = scmp.eq.s32.totalorder %s14, 1
      %p116 = scmp.ne.s32.totalorder %s111, %s113
      %p117 = scmp.eq.s32.totalorder %s14, 0
      %p118 = por %p116, %p117
      %p119 = scmp.ne.s32.totalorder %s111, %s113
      %p120 = scmp.eq.s32.totalorder %s19, 1
      %p121 = por %p119, %p120
      %p122 = scmp.ne.s32.totalorder %s113, %s114
      %p123 = scmp.eq.s32.totalorder %s19, 0
      %p124 = por %p122, %p123
      %p125 = scmp.ne.s32.totalorder %s113, %s114
      %p126 = scmp.eq.s32.totalorder %s20, 1
      %p127 = por %p125, %p126
      %p129 = scmp.ne.s32.totalorder %s114, %s128
      %p130 = scmp.eq.s32.totalorder %s20, 0
      %p131 = por %p129, %p130
      %s132 = ssub.s32 %s14, %s21
      %p133 = scmp.eq.s32.totalorder %s132, 0
      %s135 = sadd.s32 %s134, 1
      %s136 = scalar_select %p133, %s134, %s135
      %p139 = pneg %p133
      %p140 = scmp.eq.s32.totalorder %s14, 1
      %p141 = por %p139, %p140
      %p142 = scmp.ne.s32.totalorder %s134, %s137
      %p143 = scmp.eq.s32.totalorder %s14, 0
      %p144 = por %p142, %p143
      %p145 = scmp.ne.s32.totalorder %s134, %s137
      %p146 = scmp.eq.s32.totalorder %s19, 1
      %p147 = por %p145, %p146
      %p148 = scmp.ne.s32.totalorder %s137, %s138
      %p149 = scmp.eq.s32.totalorder %s19, 0
      %p150 = por %p148, %p149
      %p151 = scmp.ne.s32.totalorder %s137, %s138
      %p152 = scmp.eq.s32.totalorder %s20, 1
      %p153 = por %p151, %p152
      %p155 = scmp.ne.s32.totalorder %s138, %s154
      %p156 = scmp.eq.s32.totalorder %s20, 0
      %p157 = por %p155, %p156
      %p158 = scmp.le.s32.totalorder 1, %s14
      %p159 = scmp.lt.s32.totalorder %s14, 3
      %p160 = pnand %p158, %p159
      %p161 = pneg %p160
      // Predicated region
      $region9: #{tpu_custom_call.1} parent=5 // pred_check
        _
      $region10: #{tpu_custom_call.1} parent=5 // pred_check_branch
        %163 = sbr.rel (%p160) target = $region12
      $region11: #{tpu_custom_call.1} parent=5 // pred_region
        %s164 = ssub.s32 %s14, 1
        // Predicated region
        $region13: #{tpu_custom_call.1} parent=11 // pred_check
          %p165 = pneg %p61
        $region14: #{tpu_custom_call.1} parent=11 // pred_check_branch
          %167 = sbr.rel (%p165) target = $region16
        $region15: #{tpu_custom_call.1} parent=11 // pred_region
          _
        $region16: #{tpu_custom_call.1} parent=11 // pred_fallthru
          _
        // Predicated region
        $region17: #{tpu_custom_call.1} parent=11 // pred_check
          %p168 = pneg %p82
        $region18: #{tpu_custom_call.1} parent=11 // pred_check_branch
          %170 = sbr.rel (%p168) target = $region20
        $region19: #{tpu_custom_call.1} parent=11 // pred_region
          _
        $region20: #{tpu_custom_call.1} parent=11 // pred_fallthru
          _
        // Predicated region
        $region21: #{tpu_custom_call.1} parent=11 // pred_check
          %p171 = pneg %p103
        $region22: #{tpu_custom_call.1} parent=11 // pred_check_branch
          %173 = sbr.rel (%p171) target = $region24
        $region23: #{tpu_custom_call.1} parent=11 // pred_region
          _
        $region24: #{tpu_custom_call.1} parent=11 // pred_fallthru
          _
        // Predicated region
        $region25: #{tpu_custom_call.1} parent=11 // pred_check
          %p174 = pneg %p124
        $region26: #{tpu_custom_call.1} parent=11 // pred_check_branch
          %176 = sbr.rel (%p174) target = $region28
        $region27: #{tpu_custom_call.1} parent=11 // pred_region
          _
        $region28: #{tpu_custom_call.1} parent=11 // pred_fallthru
          _
      $region12: #{tpu_custom_call.1} parent=5 // pred_fallthru
        _
      %p177 = scmp.lt.s32.totalorder %s14, 2
      // Predicated region
      $region29: #{tpu_custom_call.1} parent=5 // pred_check
        %p178 = pneg %p177
      $region30: #{tpu_custom_call.1} parent=5 // pred_check_branch
        %180 = sbr.rel (%p178) target = $region32
      $region31: #{tpu_custom_call.1} parent=5 // pred_region
        // Predicated region
        $region33: #{tpu_custom_call.1} parent=31 // pred_check
          %p181 = pneg %p34
        $region34: #{tpu_custom_call.1} parent=31 // pred_check_branch
          %183 = sbr.rel (%p181) target = $region36
        $region35: #{tpu_custom_call.1} parent=31 // pred_region
          %s184 = smul.u32 16, %s14
          %p185 = scmp.lt.s32.totalorder %s184, 31
          %s186 = scalar_select %p185, %s184, 31
          %s187 = smul.addr %s186, 8
          %s188 = scalar_lea.vmem %s0, %s187
          %s189 = smul.u32 16, %s14
        $region36: #{tpu_custom_call.1} parent=31 // pred_fallthru
          _
      $region32: #{tpu_custom_call.1} parent=5 // pred_fallthru
        _
      %p190 = scmp.le.s32.totalorder 1, %s14
      %p191 = scmp.lt.s32.totalorder %s14, 3
      %p192 = pnand %p190, %p191
      %p193 = pneg %p192
      // Predicated region
      $region37: #{tpu_custom_call.1} parent=5 // pred_check
        _
      $region38: #{tpu_custom_call.1} parent=5 // pred_check_branch
        %195 = sbr.rel (%p192) target = $region40
      $region39: #{tpu_custom_call.1} parent=5 // pred_region
        %s196 = ssub.s32 %s14, 1
        %s197 = smul.u32 16, %s19
        %p198 = scmp.lt.s32.totalorder %s197, 31
        %s199 = scalar_select %p198, %s197, 31
        %s200 = smul.addr %s199, 8
        %s201 = scalar_lea.vmem %s0, %s200
        %p202 = pneg %p40
        %p203 = pneg %p37
        %p204 = pneg %p61
        %p205 = pneg %p58
        %p206 = pneg %p82
        %p207 = pneg %p79
        %p208 = pneg %p103
        %p209 = pneg %p100
        %p210 = pneg %p124
        %p211 = pneg %p121
        %p212 = pneg %p150
        %p213 = pneg %p147
        %s214 = sand.u32 %s137, 1
        %s215 = scalar_lea.sflag [#allocation3], %s214
        %s216 = sand.u32 %s137, 1
        %s217 = smul.addr %s216, 128
        %s218 = scalar_lea.vmem [#allocation2], %s217
        %s219 = smul.u32 16, %s19
        %p220 = scmp.lt.s32.totalorder %s219, 31
        %s221 = scalar_select %p220, %s219, 31
        %s222 = smul.addr %s221, 8
        %s223 = scalar_lea.vmem %s0, %s222
        %s224 = smul.u32 16, %s19
        %s225 = smul.u32 16, %s19
        %v226 = vld [vmem:[%s223] sm:$0xff]
        %v227 = vld [vmem:[%s223 + $0x8] sm:$0xff]
        %v228 = vld [vmem:[%s223 + $0x10] sm:$0xff]
        %v229 = vld [vmem:[%s223 + $0x18] sm:$0xff]
        %v230 = vld [vmem:[%s223 + $0x20] sm:$0xff]
        %v231 = vld [vmem:[%s223 + $0x28] sm:$0xff]
        %v232 = vld [vmem:[%s223 + $0x30] sm:$0xff]
        %v233 = vld [vmem:[%s223 + $0x38] sm:$0xff]
        %v234 = vld [vmem:[%s223 + $0x40] sm:$0xff]
        %v235 = vld [vmem:[%s223 + $0x48] sm:$0xff]
        %v236 = vld [vmem:[%s223 + $0x50] sm:$0xff]
        %v237 = vld [vmem:[%s223 + $0x58] sm:$0xff]
        %v238 = vld [vmem:[%s223 + $0x60] sm:$0xff]
        %v239 = vld [vmem:[%s223 + $0x68] sm:$0xff]
        %v240 = vld [vmem:[%s223 + $0x70] sm:$0xff]
        %v241 = vld [vmem:[%s223 + $0x78] sm:$0xff]
        %v242 = vld [vmem:[%s1] sm:$0xff]
        %v243 = vld [vmem:[%s1 + $0x8] sm:$0xff]
        %v244 = vld [vmem:[%s1 + $0x10] sm:$0xff]
        %v245 = vld [vmem:[%s1 + $0x18] sm:$0xff]
        %v246 = vld [vmem:[%s1 + $0x20] sm:$0xff]
        %v247 = vld [vmem:[%s1 + $0x28] sm:$0xff]
        %v248 = vld [vmem:[%s1 + $0x30] sm:$0xff]
        %v249 = vld [vmem:[%s1 + $0x38] sm:$0xff]
        %v250 = vld [vmem:[%s2] sm:$0x1]
        %v252 = vlaneseq
        %v253 = vshrl.u32 %v252, 7
        %v254 = vsub.s32 0, %v253
        %v255 = vrot.slane %v250, %v254
        %vm257 = vcmask 261120
        %v259 = vsel %vm257, %v226, 0
        %v262 = vsel %vm257, %v227, 0
        %v265 = vsel %vm257, %v228, 0
        %v268 = vsel %vm257, %v229, 0
        %v271 = vsel %vm257, %v230, 0
        %v274 = vsel %vm257, %v231, 0
        %v277 = vsel %vm257, %v232, 0
        %v280 = vsel %vm257, %v233, 0
        %v283 = vsel %vm257, %v234, 0
        %v286 = vsel %vm257, %v235, 0
        %v289 = vsel %vm257, %v236, 0
        %v292 = vsel %vm257, %v237, 0
        %v295 = vsel %vm257, %v238, 0
        %v298 = vsel %vm257, %v239, 0
        %v301 = vsel %vm257, %v240, 0
        %v304 = vsel %vm257, %v241, 0
        %v307 = vsel %vm257, %v242, 0
        %v310 = vsel %vm257, %v243, 0
        %v313 = vsel %vm257, %v244, 0
        %v316 = vsel %vm257, %v245, 0
        %v319 = vsel %vm257, %v246, 0
        %v322 = vsel %vm257, %v247, 0
        %v325 = vsel %vm257, %v248, 0
        %v328 = vsel %vm257, %v249, 0
        %330 = vmatprep.subr.mxu0 0.0
        %331 = vmatpush1.xpose.msra.mxu0 0.0
        %332 = vmatprep.subr.mxu0 0.0
        %333 = vmatpush1.xpose.msra.mxu0 0.0
        %334 = vmatprep.subr.mxu0 0.0
        %335 = vmatpush1.xpose.msra.mxu0 0.0
        %336 = vmatprep.subr.mxu0 0.0
        %337 = vmatpush1.xpose.msra.mxu0 0.0
        %338 = vmatprep.subr.mxu0 0.0
        %339 = vmatpush1.xpose.msra.mxu0 0.0
        %340 = vmatprep.subr.mxu0 0.0
        %341 = vmatpush1.xpose.msra.mxu0 0.0
        %342 = vmatprep.subr.mxu0 0.0
        %343 = vmatpush1.xpose.msra.mxu0 0.0
        %344 = vmatprep.subr.mxu0 0.0
        %345 = vmatpush1.xpose.msra.mxu0 0.0
        %346 = vmatprep.subr.mxu0 0.0
        %347 = vmatpush1.xpose.msra.mxu0 %v328
        %348 = vmatprep.subr.mxu0 0.0
        %349 = vmatpush1.xpose.msra.mxu0 %v325
        %350 = vmatprep.subr.mxu0 0.0
        %351 = vmatpush1.xpose.msra.mxu0 %v322
        %352 = vmatprep.subr.mxu0 0.0
        %353 = vmatpush1.xpose.msra.mxu0 %v319
        %354 = vmatprep.subr.mxu0 0.0
        %355 = vmatpush1.xpose.msra.mxu0 %v316
        %356 = vmatprep.subr.mxu0 0.0
        %357 = vmatpush1.xpose.msra.mxu0 %v313
        %358 = vmatprep.subr.mxu0 0.0
        %359 = vmatpush1.xpose.msra.mxu0 %v310
        %360 = vmatprep.subr.mxu0 0.0
        %361 = vmatpush1.xpose.msra.mxu0 %v307
        %362 = vmatprep.subr.mxu0 0.0
        %363 = vmatpush2.xpose.msra.mxu0 0.0
        %364 = vmatprep.subr.mxu0 0.0
        %365 = vmatpush2.xpose.msra.mxu0 0.0
        %366 = vmatprep.subr.mxu0 0.0
        %367 = vmatpush2.xpose.msra.mxu0 0.0
        %368 = vmatprep.subr.mxu0 0.0
        %369 = vmatpush2.xpose.msra.mxu0 0.0
        %370 = vmatprep.subr.mxu0 0.0
        %371 = vmatpush2.xpose.msra.mxu0 0.0
        %372 = vmatprep.subr.mxu0 0.0
        %373 = vmatpush2.xpose.msra.mxu0 0.0
        %374 = vmatprep.subr.mxu0 0.0
        %375 = vmatpush2.xpose.msra.mxu0 0.0
        %376 = vmatprep.subr.mxu0 0.0
        %377 = vmatpush2.xpose.msra.mxu0 0.0
        %378 = vmatprep.subr.mxu0 0.0
        %379 = vmatpush2.xpose.msra.mxu0 0.0
        %380 = vmatprep.subr.mxu0 0.0
        %381 = vmatpush2.xpose.msra.mxu0 0.0
        %382 = vmatprep.subr.mxu0 0.0
        %383 = vmatpush2.xpose.msra.mxu0 0.0
        %384 = vmatprep.subr.mxu0 0.0
        %385 = vmatpush2.xpose.msra.mxu0 0.0
        %386 = vmatprep.subr.mxu0 0.0
        %387 = vmatpush2.xpose.msra.mxu0 0.0
        %388 = vmatprep.subr.mxu0 0.0
        %389 = vmatpush2.xpose.msra.mxu0 0.0
        %390 = vmatprep.subr.mxu0 0.0
        %391 = vmatpush2.xpose.msra.mxu0 0.0
        %392 = vmatprep.subr.mxu0 0.0
        %393 = vmatpush2.xpose.msra.mxu0 0.0
        %394 = vmatprep.mubr.f32.mxu0 0.0
        %395 = vmatmul.mubr.f32.gmra.mxu0 %v259
        %v396 = vpop.f32.mrf.mxu0
        %v397 = vadd.f32 %v255, %v396
        %v398 = vpop.f32.mrf.mxu0
        %399 = vmatprep.mubr.f32.mxu0 0.0
        %400 = vmatmul.mubr.f32.gmra.mxu0 %v262
        %v401 = vpop.f32.mrf.mxu0
        %v402 = vadd.f32 %v255, %v401
        %v403 = vpop.f32.mrf.mxu0
        %404 = vmatprep.mubr.f32.mxu0 0.0
        %405 = vmatmul.mubr.f32.gmra.mxu0 %v265
        %v406 = vpop.f32.mrf.mxu0
        %v407 = vadd.f32 %v255, %v406
        %v408 = vpop.f32.mrf.mxu0
        %409 = vmatprep.mubr.f32.mxu0 0.0
        %410 = vmatmul.mubr.f32.gmra.mxu0 %v268
        %v411 = vpop.f32.mrf.mxu0
        %v412 = vadd.f32 %v255, %v411
        %v413 = vpop.f32.mrf.mxu0
        %414 = vmatprep.mubr.f32.mxu0 0.0
        %415 = vmatmul.mubr.f32.gmra.mxu0 %v271
        %v416 = vpop.f32.mrf.mxu0
        %v417 = vadd.f32 %v255, %v416
        %v418 = vpop.f32.mrf.mxu0
        %419 = vmatprep.mubr.f32.mxu0 0.0
        %420 = vmatmul.mubr.f32.gmra.mxu0 %v274
        %v421 = vpop.f32.mrf.mxu0
        %v422 = vadd.f32 %v255, %v421
        %v423 = vpop.f32.mrf.mxu0
        %424 = vmatprep.mubr.f32.mxu0 0.0
        %425 = vmatmul.mubr.f32.gmra.mxu0 %v277
        %v426 = vpop.f32.mrf.mxu0
        %v427 = vadd.f32 %v255, %v426
        %v428 = vpop.f32.mrf.mxu0
        %429 = vmatprep.mubr.f32.mxu0 0.0
        %430 = vmatmul.mubr.f32.gmra.mxu0 %v280
        %v431 = vpop.f32.mrf.mxu0
        %v432 = vadd.f32 %v255, %v431
        %v433 = vpop.f32.mrf.mxu0
        %434 = vmatprep.mubr.f32.mxu0 0.0
        %435 = vmatmul.mubr.f32.gmra.mxu0 %v283
        %v436 = vpop.f32.mrf.mxu0
        %v437 = vadd.f32 %v255, %v436
        %v438 = vpop.f32.mrf.mxu0
        %439 = vmatprep.mubr.f32.mxu0 0.0
        %440 = vmatmul.mubr.f32.gmra.mxu0 %v286
        %v441 = vpop.f32.mrf.mxu0
        %v442 = vadd.f32 %v255, %v441
        %v443 = vpop.f32.mrf.mxu0
        %444 = vmatprep.mubr.f32.mxu0 0.0
        %445 = vmatmul.mubr.f32.gmra.mxu0 %v289
        %v446 = vpop.f32.mrf.mxu0
        %v447 = vadd.f32 %v255, %v446
        %v448 = vpop.f32.mrf.mxu0
        %449 = vmatprep.mubr.f32.mxu0 0.0
        %450 = vmatmul.mubr.f32.gmra.mxu0 %v292
        %v451 = vpop.f32.mrf.mxu0
        %v452 = vadd.f32 %v255, %v451
        %v453 = vpop.f32.mrf.mxu0
        %454 = vmatprep.mubr.f32.mxu0 0.0
        %455 = vmatmul.mubr.f32.gmra.mxu0 %v295
        %v456 = vpop.f32.mrf.mxu0
        %v457 = vadd.f32 %v255, %v456
        %v458 = vpop.f32.mrf.mxu0
        %459 = vmatprep.mubr.f32.mxu0 0.0
        %460 = vmatmul.mubr.f32.gmra.mxu0 %v298
        %v461 = vpop.f32.mrf.mxu0
        %v462 = vadd.f32 %v255, %v461
        %v463 = vpop.f32.mrf.mxu0
        %464 = vmatprep.mubr.f32.mxu0 0.0
        %465 = vmatmul.mubr.f32.gmra.mxu0 %v301
        %v466 = vpop.f32.mrf.mxu0
        %v467 = vadd.f32 %v255, %v466
        %v468 = vpop.f32.mrf.mxu0
        %469 = vmatprep.mubr.f32.mxu0 0.0
        %470 = vmatmul.mubr.f32.gmra.mxu0 %v304
        %v471 = vpop.f32.mrf.mxu0
        %v472 = vadd.f32 %v255, %v471
        %v473 = vpop.f32.mrf.mxu0
        %474 = vdwg.mxu0
        %v475 = vtanh.pop %v397
        %v476 = vtanh.pop %v402
        %v477 = vtanh.pop %v407
        %v478 = vtanh.pop %v412
        %v479 = vtanh.pop %v417
        %v480 = vtanh.pop %v422
        %v481 = vtanh.pop %v427
        %v482 = vtanh.pop %v432
        %v483 = vtanh.pop %v437
        %v484 = vtanh.pop %v442
        %v485 = vtanh.pop %v447
        %v486 = vtanh.pop %v452
        %v487 = vtanh.pop %v457
        %v488 = vtanh.pop %v462
        %v489 = vtanh.pop %v467
        %v490 = vtanh.pop %v472
        %v491 = vld [vmem:[%s3] sm:$0xff]
        %v492 = vld [vmem:[%s3 + $0x8] sm:$0xff]
        %v493 = vld [vmem:[%s3 + $0x10] sm:$0xff]
        %v494 = vld [vmem:[%s3 + $0x18] sm:$0xff]
        %v495 = vld [vmem:[%s3 + $0x20] sm:$0xff]
        %v496 = vld [vmem:[%s3 + $0x28] sm:$0xff]
        %v497 = vld [vmem:[%s3 + $0x30] sm:$0xff]
        %v498 = vld [vmem:[%s3 + $0x38] sm:$0xff]
        %v499 = vld [vmem:[%s3 + $0x40] sm:$0xff]
        %v500 = vld [vmem:[%s3 + $0x48] sm:$0xff]
        %v501 = vld [vmem:[%s3 + $0x50] sm:$0xff]
        %v502 = vld [vmem:[%s3 + $0x58] sm:$0xff]
        %v503 = vld [vmem:[%s3 + $0x60] sm:$0xff]
        %v504 = vld [vmem:[%s3 + $0x68] sm:$0xff]
        %v505 = vld [vmem:[%s3 + $0x70] sm:$0xff]
        %v506 = vld [vmem:[%s3 + $0x78] sm:$0xff]
        %v507 = vld [vmem:[%s4] sm:$0x1]
        %v509 = vlaneseq
        %v510 = vshrl.u32 %v509, 7
        %v511 = vsub.s32 0, %v510
        %v512 = vrot.slane %v507, %v511
        %vm514 = vcmask 523264
        %v516 = vsel %vm514, %v475, 0
        %v519 = vsel %vm514, %v476, 0
        %v522 = vsel %vm514, %v477, 0
        %v525 = vsel %vm514, %v478, 0
        %v528 = vsel %vm514, %v479, 0
        %v531 = vsel %vm514, %v480, 0
        %v534 = vsel %vm514, %v481, 0
        %v537 = vsel %vm514, %v482, 0
        %v540 = vsel %vm514, %v483, 0
        %v543 = vsel %vm514, %v484, 0
        %v546 = vsel %vm514, %v485, 0
        %v549 = vsel %vm514, %v486, 0
        %v552 = vsel %vm514, %v487, 0
        %v555 = vsel %vm514, %v488, 0
        %v558 = vsel %vm514, %v489, 0
        %v561 = vsel %vm514, %v490, 0
        %v564 = vsel %vm514, %v491, 0
        %v567 = vsel %vm514, %v492, 0
        %v570 = vsel %vm514, %v493, 0
        %v573 = vsel %vm514, %v494, 0
        %v576 = vsel %vm514, %v495, 0
        %v579 = vsel %vm514, %v496, 0
        %v582 = vsel %vm514, %v497, 0
        %v585 = vsel %vm514, %v498, 0
        %v588 = vsel %vm514, %v499, 0
        %v591 = vsel %vm514, %v500, 0
        %v594 = vsel %vm514, %v501, 0
        %v597 = vsel %vm514, %v502, 0
        %v600 = vsel %vm514, %v503, 0
        %v603 = vsel %vm514, %v504, 0
        %v606 = vsel %vm514, %v505, 0
        %v609 = vsel %vm514, %v506, 0
        %611 = vmatprep.subr.mxu0 0.0
        %612 = vmatpush1.xpose.msra.mxu0 %v609
        %613 = vmatprep.subr.mxu0 0.0
        %614 = vmatpush1.xpose.msra.mxu0 %v606
        %615 = vmatprep.subr.mxu0 0.0
        %616 = vmatpush1.xpose.msra.mxu0 %v603
        %617 = vmatprep.subr.mxu0 0.0
        %618 = vmatpush1.xpose.msra.mxu0 %v600
        %619 = vmatprep.subr.mxu0 0.0
        %620 = vmatpush1.xpose.msra.mxu0 %v597
        %621 = vmatprep.subr.mxu0 0.0
        %622 = vmatpush1.xpose.msra.mxu0 %v594
        %623 = vmatprep.subr.mxu0 0.0
        %624 = vmatpush1.xpose.msra.mxu0 %v591
        %625 = vmatprep.subr.mxu0 0.0
        %626 = vmatpush1.xpose.msra.mxu0 %v588
        %627 = vmatprep.subr.mxu0 0.0
        %628 = vmatpush1.xpose.msra.mxu0 %v585
        %629 = vmatprep.subr.mxu0 0.0
        %630 = vmatpush1.xpose.msra.mxu0 %v582
        %631 = vmatprep.subr.mxu0 0.0
        %632 = vmatpush1.xpose.msra.mxu0 %v579
        %633 = vmatprep.subr.mxu0 0.0
        %634 = vmatpush1.xpose.msra.mxu0 %v576
        %635 = vmatprep.subr.mxu0 0.0
        %636 = vmatpush1.xpose.msra.mxu0 %v573
        %637 = vmatprep.subr.mxu0 0.0
        %638 = vmatpush1.xpose.msra.mxu0 %v570
        %639 = vmatprep.subr.mxu0 0.0
        %640 = vmatpush1.xpose.msra.mxu0 %v567
        %641 = vmatprep.subr.mxu0 0.0
        %642 = vmatpush1.xpose.msra.mxu0 %v564
        %643 = vmatprep.subr.mxu0 0.0
        %644 = vmatpush2.xpose.msra.mxu0 0.0
        %645 = vmatprep.subr.mxu0 0.0
        %646 = vmatpush2.xpose.msra.mxu0 0.0
        %647 = vmatprep.subr.mxu0 0.0
        %648 = vmatpush2.xpose.msra.mxu0 0.0
        %649 = vmatprep.subr.mxu0 0.0
        %650 = vmatpush2.xpose.msra.mxu0 0.0
        %651 = vmatprep.subr.mxu0 0.0
        %652 = vmatpush2.xpose.msra.mxu0 0.0
        %653 = vmatprep.subr.mxu0 0.0
        %654 = vmatpush2.xpose.msra.mxu0 0.0
        %655 = vmatprep.subr.mxu0 0.0
        %656 = vmatpush2.xpose.msra.mxu0 0.0
        %657 = vmatprep.subr.mxu0 0.0
        %658 = vmatpush2.xpose.msra.mxu0 0.0
        %659 = vmatprep.subr.mxu0 0.0
        %660 = vmatpush2.xpose.msra.mxu0 0.0
        %661 = vmatprep.subr.mxu0 0.0
        %662 = vmatpush2.xpose.msra.mxu0 0.0
        %663 = vmatprep.subr.mxu0 0.0
        %664 = vmatpush2.xpose.msra.mxu0 0.0
        %665 = vmatprep.subr.mxu0 0.0
        %666 = vmatpush2.xpose.msra.mxu0 0.0
        %667 = vmatprep.subr.mxu0 0.0
        %668 = vmatpush2.xpose.msra.mxu0 0.0
        %669 = vmatprep.subr.mxu0 0.0
        %670 = vmatpush2.xpose.msra.mxu0 0.0
        %671 = vmatprep.subr.mxu0 0.0
        %672 = vmatpush2.xpose.msra.mxu0 0.0
        %673 = vmatprep.subr.mxu0 0.0
        %674 = vmatpush2.xpose.msra.mxu0 0.0
        %675 = vmatprep.mubr.f32.mxu0 0.0
        %676 = vmatmul.mubr.f32.gmra.mxu0 %v516
        %v677 = vpop.f32.mrf.mxu0
        %v678 = vadd.f32 %v512, %v677
        %v679 = vpop.f32.mrf.mxu0
        %680 = vmatprep.mubr.f32.mxu0 0.0
        %681 = vmatmul.mubr.f32.gmra.mxu0 %v519
        %v682 = vpop.f32.mrf.mxu0
        %v683 = vadd.f32 %v512, %v682
        %v684 = vpop.f32.mrf.mxu0
        %685 = vmatprep.mubr.f32.mxu0 0.0
        %686 = vmatmul.mubr.f32.gmra.mxu0 %v522
        %v687 = vpop.f32.mrf.mxu0
        %v688 = vadd.f32 %v512, %v687
        %v689 = vpop.f32.mrf.mxu0
        %690 = vmatprep.mubr.f32.mxu0 0.0
        %691 = vmatmul.mubr.f32.gmra.mxu0 %v525
        %v692 = vpop.f32.mrf.mxu0
        %v693 = vadd.f32 %v512, %v692
        %v694 = vpop.f32.mrf.mxu0
        %695 = vmatprep.mubr.f32.mxu0 0.0
        %696 = vmatmul.mubr.f32.gmra.mxu0 %v528
        %v697 = vpop.f32.mrf.mxu0
        %v698 = vadd.f32 %v512, %v697
        %v699 = vpop.f32.mrf.mxu0
        %700 = vmatprep.mubr.f32.mxu0 0.0
        %701 = vmatmul.mubr.f32.gmra.mxu0 %v531
        %v702 = vpop.f32.mrf.mxu0
        %v703 = vadd.f32 %v512, %v702
        %v704 = vpop.f32.mrf.mxu0
        %705 = vmatprep.mubr.f32.mxu0 0.0
        %706 = vmatmul.mubr.f32.gmra.mxu0 %v534
        %v707 = vpop.f32.mrf.mxu0
        %v708 = vadd.f32 %v512, %v707
        %v709 = vpop.f32.mrf.mxu0
        %710 = vmatprep.mubr.f32.mxu0 0.0
        %711 = vmatmul.mubr.f32.gmra.mxu0 %v537
        %v712 = vpop.f32.mrf.mxu0
        %v713 = vadd.f32 %v512, %v712
        %v714 = vpop.f32.mrf.mxu0
        %715 = vmatprep.mubr.f32.mxu0 0.0
        %716 = vmatmul.mubr.f32.gmra.mxu0 %v540
        %v717 = vpop.f32.mrf.mxu0
        %v718 = vadd.f32 %v512, %v717
        %v719 = vpop.f32.mrf.mxu0
        %720 = vmatprep.mubr.f32.mxu0 0.0
        %721 = vmatmul.mubr.f32.gmra.mxu0 %v543
        %v722 = vpop.f32.mrf.mxu0
        %v723 = vadd.f32 %v512, %v722
        %v724 = vpop.f32.mrf.mxu0
        %725 = vmatprep.mubr.f32.mxu0 0.0
        %726 = vmatmul.mubr.f32.gmra.mxu0 %v546
        %v727 = vpop.f32.mrf.mxu0
        %v728 = vadd.f32 %v512, %v727
        %v729 = vpop.f32.mrf.mxu0
        %730 = vmatprep.mubr.f32.mxu0 0.0
        %731 = vmatmul.mubr.f32.gmra.mxu0 %v549
        %v732 = vpop.f32.mrf.mxu0
        %v733 = vadd.f32 %v512, %v732
        %v734 = vpop.f32.mrf.mxu0
        %735 = vmatprep.mubr.f32.mxu0 0.0
        %736 = vmatmul.mubr.f32.gmra.mxu0 %v552
        %v737 = vpop.f32.mrf.mxu0
        %v738 = vadd.f32 %v512, %v737
        %v739 = vpop.f32.mrf.mxu0
        %740 = vmatprep.mubr.f32.mxu0 0.0
        %741 = vmatmul.mubr.f32.gmra.mxu0 %v555
        %v742 = vpop.f32.mrf.mxu0
        %v743 = vadd.f32 %v512, %v742
        %v744 = vpop.f32.mrf.mxu0
        %745 = vmatprep.mubr.f32.mxu0 0.0
        %746 = vmatmul.mubr.f32.gmra.mxu0 %v558
        %v747 = vpop.f32.mrf.mxu0
        %v748 = vadd.f32 %v512, %v747
        %v749 = vpop.f32.mrf.mxu0
        %750 = vmatprep.mubr.f32.mxu0 0.0
        %751 = vmatmul.mubr.f32.gmra.mxu0 %v561
        %v752 = vpop.f32.mrf.mxu0
        %v753 = vadd.f32 %v512, %v752
        %v754 = vpop.f32.mrf.mxu0
        %755 = vdwg.mxu0
        %v756 = vxor.u32 %v678, 2147483648
        %v757 = vxor.u32 %v683, 2147483648
        %v758 = vxor.u32 %v688, 2147483648
        %v759 = vxor.u32 %v693, 2147483648
        %v760 = vxor.u32 %v698, 2147483648
        %v761 = vxor.u32 %v703, 2147483648
        %v762 = vxor.u32 %v708, 2147483648
        %v763 = vxor.u32 %v713, 2147483648
        %v764 = vxor.u32 %v718, 2147483648
        %v765 = vxor.u32 %v723, 2147483648
        %v766 = vxor.u32 %v728, 2147483648
        %v767 = vxor.u32 %v733, 2147483648
        %v768 = vxor.u32 %v738, 2147483648
        %v769 = vxor.u32 %v743, 2147483648
        %v770 = vxor.u32 %v748, 2147483648
        %v771 = vxor.u32 %v753, 2147483648
        %v772 = vmul.f32 %v756, 1.442695
        %v773 = vpow.pop %v772
        %v774 = vmul.f32 %v757, 1.442695
        %v775 = vpow.pop %v774
        %v776 = vmul.f32 %v758, 1.442695
        %v777 = vpow.pop %v776
        %v778 = vmul.f32 %v759, 1.442695
        %v779 = vpow.pop %v778
        %v780 = vmul.f32 %v760, 1.442695
        %v781 = vpow.pop %v780
        %v782 = vmul.f32 %v761, 1.442695
        %v783 = vpow.pop %v782
        %v784 = vmul.f32 %v762, 1.442695
        %v785 = vpow.pop %v784
        %v786 = vmul.f32 %v763, 1.442695
        %v787 = vpow.pop %v786
        %v788 = vmul.f32 %v764, 1.442695
        %v789 = vpow.pop %v788
        %v790 = vmul.f32 %v765, 1.442695
        %v791 = vpow.pop %v790
        %v792 = vmul.f32 %v766, 1.442695
        %v793 = vpow.pop %v792
        %v794 = vmul.f32 %v767, 1.442695
        %v795 = vpow.pop %v794
        %v796 = vmul.f32 %v768, 1.442695
        %v797 = vpow.pop %v796
        %v798 = vmul.f32 %v769, 1.442695
        %v799 = vpow.pop %v798
        %v800 = vmul.f32 %v770, 1.442695
        %v801 = vpow.pop %v800
        %v802 = vmul.f32 %v771, 1.442695
        %v803 = vpow.pop %v802
        %v804 = vadd.f32 %v773, 1.0
        %v805 = vadd.f32 %v775, 1.0
        %v806 = vadd.f32 %v777, 1.0
        %v807 = vadd.f32 %v779, 1.0
        %v808 = vadd.f32 %v781, 1.0
        %v809 = vadd.f32 %v783, 1.0
        %v810 = vadd.f32 %v785, 1.0
        %v811 = vadd.f32 %v787, 1.0
        %v812 = vadd.f32 %v789, 1.0
        %v813 = vadd.f32 %v791, 1.0
        %v814 = vadd.f32 %v793, 1.0
        %v815 = vadd.f32 %v795, 1.0
        %v816 = vadd.f32 %v797, 1.0
        %v817 = vadd.f32 %v799, 1.0
        %v818 = vadd.f32 %v801, 1.0
        %v819 = vadd.f32 %v803, 1.0
        %v820 = vrcp.pop %v804
        %v821 = vmul.f32 1.0, %v820
        %v822 = vrcp.pop %v805
        %v823 = vmul.f32 1.0, %v822
        %v824 = vrcp.pop %v806
        %v825 = vmul.f32 1.0, %v824
        %v826 = vrcp.pop %v807
        %v827 = vmul.f32 1.0, %v826
        %v828 = vrcp.pop %v808
        %v829 = vmul.f32 1.0, %v828
        %v830 = vrcp.pop %v809
        %v831 = vmul.f32 1.0, %v830
        %v832 = vrcp.pop %v810
        %v833 = vmul.f32 1.0, %v832
        %v834 = vrcp.pop %v811
        %v835 = vmul.f32 1.0, %v834
        %v836 = vrcp.pop %v812
        %v837 = vmul.f32 1.0, %v836
        %v838 = vrcp.pop %v813
        %v839 = vmul.f32 1.0, %v838
        %v840 = vrcp.pop %v814
        %v841 = vmul.f32 1.0, %v840
        %v842 = vrcp.pop %v815
        %v843 = vmul.f32 1.0, %v842
        %v844 = vrcp.pop %v816
        %v845 = vmul.f32 1.0, %v844
        %v846 = vrcp.pop %v817
        %v847 = vmul.f32 1.0, %v846
        %v848 = vrcp.pop %v818
        %v849 = vmul.f32 1.0, %v848
        %v850 = vrcp.pop %v819
        %v851 = vmul.f32 1.0, %v850
        %852 = vst [vmem:[%s218] sm:$0xff] %v821
        %853 = vst [vmem:[%s218 + $0x8] sm:$0xff] %v823
        %854 = vst [vmem:[%s218 + $0x10] sm:$0xff] %v825
        %855 = vst [vmem:[%s218 + $0x18] sm:$0xff] %v827
        %856 = vst [vmem:[%s218 + $0x20] sm:$0xff] %v829
        %857 = vst [vmem:[%s218 + $0x28] sm:$0xff] %v831
        %858 = vst [vmem:[%s218 + $0x30] sm:$0xff] %v833
        %859 = vst [vmem:[%s218 + $0x38] sm:$0xff] %v835
        %860 = vst [vmem:[%s218 + $0x40] sm:$0xff] %v837
        %861 = vst [vmem:[%s218 + $0x48] sm:$0xff] %v839
        %862 = vst [vmem:[%s218 + $0x50] sm:$0xff] %v841
        %863 = vst [vmem:[%s218 + $0x58] sm:$0xff] %v843
        %864 = vst [vmem:[%s218 + $0x60] sm:$0xff] %v845
        %865 = vst [vmem:[%s218 + $0x68] sm:$0xff] %v847
        %866 = vst [vmem:[%s218 + $0x70] sm:$0xff] %v849
        %867 = vst [vmem:[%s218 + $0x78] sm:$0xff] %v851
        %s868 = sand.u32 %s137, 1
        %s869 = scalar_lea.sflag [#allocation3], %s868
        %s870 = sand.u32 %s137, 1
        %s871 = smul.addr %s870, 128
        %s872 = scalar_lea.vmem [#allocation2], %s871
        // Predicated region
        $region41: #{tpu_custom_call.1} parent=39 // pred_check
          %p873 = pneg %p147
        $region42: #{tpu_custom_call.1} parent=39 // pred_check_branch
          %875 = sbr.rel (%p873) target = $region44
        $region43: #{tpu_custom_call.1} parent=39 // pred_region
          %s876 = smul.u32 16, %s19
          %s878 = ssub.s32 2048, 2048
          %879 = vsyncadd %s869, %s878
          %s880 = smul.addr %s876, 128
          %s881 = scalar_lea.hbm %s5, %s880
          %s882 = sshll.u32 %s872, 4
          %s883 = int_to_ptr.vmem [resolvable:$true] %s882
          %888 = dma.vmem_to_hbm [thread:$0]  %s883, 2048, %s881, %s869, 128, 128, 8
        $region44: #{tpu_custom_call.1} parent=39 // pred_fallthru
          _
      $region40: #{tpu_custom_call.1} parent=5 // pred_fallthru
        _
      %p889 = scmp.le.s32.totalorder 2, %s14
      // Predicated region
      $region45: #{tpu_custom_call.1} parent=5 // pred_check
        %p890 = pneg %p889
      $region46: #{tpu_custom_call.1} parent=5 // pred_check_branch
        %892 = sbr.rel (%p890) target = $region48
      $region47: #{tpu_custom_call.1} parent=5 // pred_region
        %s893 = ssub.s32 %s14, 2
        // Predicated region
        $region49: #{tpu_custom_call.1} parent=47 // pred_check
          %p894 = pneg %p153
        $region50: #{tpu_custom_call.1} parent=47 // pred_check_branch
          %896 = sbr.rel (%p894) target = $region52
        $region51: #{tpu_custom_call.1} parent=47 // pred_region
          %s897 = sand.u32 %s138, 1
          %s898 = scalar_lea.sflag [#allocation3], %s897
          %s899 = sand.u32 %s138, 1
          %s900 = smul.addr %s899, 128
          %s901 = scalar_lea.vmem [#allocation2], %s900
          %902 = dma.done %s898, 2048
        $region52: #{tpu_custom_call.1} parent=47 // pred_fallthru
          _
      $region48: #{tpu_custom_call.1} parent=5 // pred_fallthru
        _
    $region6: #{tpu_custom_call.1} parent=1 // loop_footer
      %s18 = sadd.s32 1, %s14
    $region7: #{tpu_custom_call.1} parent=1 // loop_footer_branch
      %13 = sbr.rel target = $region3
    $region8: #{tpu_custom_call.1} parent=1 // loop_exit
      _
    %903 = vsyncpa [#allocation3], 1
    %s904 = scalar_lea.sflag [#allocation3], 1
    %905 = vsyncpa %s904, 1

</llo_original>
